<compile_context>
chip_gen: v7x
topology: tpu7x:2x2x1
jax: 0.10.0
libtpu: 0.0.40
codegen_flags: <defaults>
</compile_context>

<pallas_src>
import jax
import jax.numpy as jnp
from jax.experimental import pallas as pl
from jax.experimental.pallas import tpu as pltpu


def linear_clamp_scale_kernel(x_ref, w_ref, o_ref):
    """x_ref: SMEM (B, IN) f32; w_ref: VMEM (IN, OUT) f32; o_ref: VMEM (B, OUT)."""
    w = w_ref[...]                      # (IN, OUT) float32, one vreg-ish tile
    B = o_ref.shape[0]
    in_dim = w_ref.shape[0]

    # B and IN are tiny (1 and 3 for the spec module): fully unrolled
    # scalar-broadcast FMAs on the VPU.  Each x_ref[b, k] is an SMEM scalar,
    # so the multiply rides the scalar-broadcast operand path (no cross-lane
    # shuffles, no MXU).
    for b in range(B):
        acc = x_ref[b, 0] * w[0:1, :]
        for k in range(1, in_dim):
            acc = acc + x_ref[b, k] * w[k:k + 1, :]

        # Keep clamp(., 0, 6) then * 0.166667 ordering and the truncated
        # constant (not 1/6) to match the PyTorch module bit-for-bit.
        v1 = jnp.clip(acc, 0.0, 6.0)
        o_ref[b:b + 1, :] = (v1 * jnp.float32(0.166667)).astype(o_ref.dtype)


def model_forward(x, w_t):
    """x: (B, IN) float32, w_t: (IN, OUT) float32 -> (B, OUT) float32.

    w_t is the transposed nn.Linear weight (so out = x @ w_t == x @ W.T).
    """
    B, IN = x.shape
    IN2, OUT = w_t.shape
    assert IN == IN2

    # Enforce the no-grid / whole-array-in-VMEM assumption (see TODO above):
    # weights + output + double-buffer headroom must stay far below the
    # default 32 MiB scoped VMEM (and v7x's 64 MiB physical).
    vmem_bytes = 4 * (IN * OUT + B * OUT)
    assert vmem_bytes < (8 << 20), (
        "Batch too large for the gridless kernel; add a B-tiled grid "
        f"(would need ~{vmem_bytes} B of VMEM)."
    )

    flops = 2 * B * IN * OUT + 3 * B * OUT          # FMAs + clamp + scale
    bytes_accessed = 4 * (B * IN + IN * OUT + B * OUT)

    return pl.pallas_call(
        linear_clamp_scale_kernel,
        out_shape=jax.ShapeDtypeStruct((B, OUT), jnp.float32),
        # No grid: whole arrays live on-chip, no pipeline / index_map plumbing.
        in_specs=[
            pl.BlockSpec(memory_space=pltpu.MemorySpace.SMEM),  # x: scalars
            pl.BlockSpec(memory_space=pltpu.MemorySpace.VMEM),  # w_t
        ],
        out_specs=pl.BlockSpec(memory_space=pltpu.MemorySpace.VMEM),
        cost_estimate=pl.CostEstimate(
            flops=flops, transcendentals=0, bytes_accessed=bytes_accessed
        ),
    )(x, w_t)


if __name__ == "__main__":
    key = jax.random.PRNGKey(0)
    k_x, k_w = jax.random.split(key)

    B, IN, OUT = 1, 3, 16

    # Input like torch.randn(1, 3)
    x1 = jax.random.normal(k_x, (B, IN), dtype=jnp.float32)

    # Deterministic init mimicking nn.Linear(3, 16, bias=False):
    # weight (OUT, IN) ~ U(-1/sqrt(IN), 1/sqrt(IN))
    bound = 1.0 / jnp.sqrt(jnp.float32(IN))
    w = jax.random.uniform(k_w, (OUT, IN), dtype=jnp.float32,
                           minval=-bound, maxval=bound)
    w_t = w.T  # (IN, OUT) layout for the kernel

    out = model_forward(x1, w_t)
    jax.block_until_ready(out)

    # Cross-check against plain JAX reference (same semantics as the module).
    ref = jnp.clip(x1 @ w_t, 0.0, 6.0) * jnp.float32(0.166667)
    assert out.shape == (B, OUT)
    assert jnp.allclose(out, ref, atol=1e-5, rtol=1e-5)

    print("KERNEL_OK")
</pallas_src>

<mosaic_0001>
module attributes {stable_mosaic.version = 11 : i64} {
  func.func @linear_clamp_scale_kernel(%arg0: memref<1x3xf32, #tpu.memory_space<smem>>, %arg1: memref<3x16xf32, #tpu.memory_space<vmem>>, %arg2: memref<1x16xf32, #tpu.memory_space<vmem>>) attributes {dimension_semantics = [], scalar_prefetch = 0 : i64, scratch_operands = 0 : i64, tpu.core_type = #tpu.core_type<tc>} {
    %c0 = arith.constant 0 : index
    %c0_0 = arith.constant 0 : index
    %0 = vector.load %arg1[%c0, %c0_0] : memref<3x16xf32, #tpu.memory_space<vmem>>, vector<3x16xf32>
    %c0_1 = arith.constant 0 : index
    %c0_2 = arith.constant 0 : index
    %1 = memref.load %arg0[%c0_1, %c0_2] : memref<1x3xf32, #tpu.memory_space<smem>>
    %2 = vector.extract_strided_slice %0 {offsets = [0, 0], sizes = [1, 16], strides = [1, 1]} : vector<3x16xf32> to vector<1x16xf32>
    %3 = vector.broadcast %1 : f32 to vector<1x16xf32>
    %4 = arith.mulf %3, %2 : vector<1x16xf32>
    %c0_3 = arith.constant 0 : index
    %c1 = arith.constant 1 : index
    %5 = memref.load %arg0[%c0_3, %c1] : memref<1x3xf32, #tpu.memory_space<smem>>
    %6 = vector.extract_strided_slice %0 {offsets = [1, 0], sizes = [1, 16], strides = [1, 1]} : vector<3x16xf32> to vector<1x16xf32>
    %7 = vector.broadcast %5 : f32 to vector<1x16xf32>
    %8 = arith.mulf %7, %6 : vector<1x16xf32>
    %9 = arith.addf %4, %8 : vector<1x16xf32>
    %c0_4 = arith.constant 0 : index
    %c2 = arith.constant 2 : index
    %10 = memref.load %arg0[%c0_4, %c2] : memref<1x3xf32, #tpu.memory_space<smem>>
    %11 = vector.extract_strided_slice %0 {offsets = [2, 0], sizes = [1, 16], strides = [1, 1]} : vector<3x16xf32> to vector<1x16xf32>
    %12 = vector.broadcast %10 : f32 to vector<1x16xf32>
    %13 = arith.mulf %12, %11 : vector<1x16xf32>
    %14 = arith.addf %9, %13 : vector<1x16xf32>
    %cst = arith.constant 0.000000e+00 : f32
    %cst_5 = arith.constant 6.000000e+00 : f32
    %15 = vector.broadcast %cst : f32 to vector<1x16xf32>
    %16 = arith.maximumf %15, %14 : vector<1x16xf32>
    %17 = vector.broadcast %cst_5 : f32 to vector<1x16xf32>
    %18 = arith.minimumf %17, %16 : vector<1x16xf32>
    %cst_6 = arith.constant 1.666670e-01 : f32
    %19 = vector.broadcast %cst_6 : f32 to vector<1x16xf32>
    %20 = arith.mulf %18, %19 : vector<1x16xf32>
    %c0_7 = arith.constant 0 : index
    %c0_8 = arith.constant 0 : index
    %21 = vector.load %arg2[%c0_7, %c0_8] : memref<1x16xf32, #tpu.memory_space<vmem>>, vector<1x16xf32>
    tpu.vector_store %arg2[%c0_7, %c0_8], %20 {strides = array<i32>} : memref<1x16xf32, #tpu.memory_space<vmem>>, vector<1x16xf32>,
    return
  }
}

</mosaic_0001>

<llo_original>
// kernel: tpu_custom_call.1
$region0: #{tpu_custom_call.1}
  #allocation0 [shape = 'u32[]', space=smem, size = 0x4, offset = 0x4, fixed_abs, tag = 'smem constant byte address 0x4 - core index']
  #allocation1 [shape = 'u32[144,128]{1,0:T(1,128)}', space=vmem, size = 0x12000, scoped, tag = 'internal scratch']
  %s0 = inlined_call_operand.hbm [shape: f32[1,3], index: 0, kind: input, shape index: {}]
  %s1 = inlined_call_operand.hbm [shape: f32[3,16], index: 1, kind: input, shape index: {}]
  %s2 = inlined_call_operand.hbm [shape: f32[1,16], index: 2, kind: output, shape index: {}]
  %s3 = sld [smem:[#allocation0]]
  $region26: #{tpu_custom_call.1} parent=0
    _
  %s5 = ssub.s32 1, %s3
  %s6 = scalar_select 0, %s5, %s3
  $region1: #{tpu_custom_call.1} parent=0
    #allocation2 [shape = 'u8[512]{0}', space=smem, size = 0x200, scoped, tag = 'input window, operand 0, single buffered']
    #allocation3 [shape = 's32[1]{0}', space=sflag, size = 0x4, scoped, tag = 'scoped memory for tpu_custom_call.1']
    #allocation4 [shape = 's32[1]{0}', space=sflag, size = 0x4, scoped, tag = 'scoped memory for tpu_custom_call.1']
    #allocation5 [shape = 's32[1]{0}', space=sflag, size = 0x4, scoped, tag = 'scoped memory for tpu_custom_call.1']
    #allocation6 [shape = 'u8[2048]{0}', space=vmem, size = 0x800, scoped, tag = 'input window, operand 1, single buffered']
    #allocation7 [shape = 'u8[512]{0}', space=vmem, size = 0x400, scoped, tag = 'output window, operand 0, single buffered']
    %7 = vsyncpa [#allocation5], 0
    %8 = vsyncpa [#allocation3], 0
    %9 = vsyncpa [#allocation4], 0
    // Predicated region
    $region2: #{tpu_custom_call.1} parent=1 // pred_check
      _
    $region3: #{tpu_custom_call.1} parent=1 // pred_check_branch
      %11 = sbr.rel (0) target = $region5
    $region4: #{tpu_custom_call.1} parent=1 // pred_region
      %s13 = ssub.s32 16, 16
      %14 = vsyncadd [#allocation5], %s13
      %17 = dma.hbm_to_smem %s0, 16, [#allocation2], [#allocation5]
    $region5: #{tpu_custom_call.1} parent=1 // pred_fallthru
      _
    // Predicated region
    $region6: #{tpu_custom_call.1} parent=1 // pred_check
      _
    $region7: #{tpu_custom_call.1} parent=1 // pred_check_branch
      %19 = sbr.rel (0) target = $region9
    $region8: #{tpu_custom_call.1} parent=1 // pred_region
      %s21 = ssub.s32 64, 64
      %22 = vsyncadd [#allocation3], %s21
      %s24 = sshll.u32 [#allocation6], 4
      %s25 = int_to_ptr.vmem [resolvable:$true] %s24
      %27 = dma.hbm_to_vmem [thread:$0]  %s1, 64, %s25, [#allocation3]
    $region9: #{tpu_custom_call.1} parent=1 // pred_fallthru
      _
    // Predicated region
    $region10: #{tpu_custom_call.1} parent=1 // pred_check
      _
    $region11: #{tpu_custom_call.1} parent=1 // pred_check_branch
      %29 = sbr.rel (0) target = $region13
    $region12: #{tpu_custom_call.1} parent=1 // pred_region
      %30 = dma.done [#allocation5], 16
    $region13: #{tpu_custom_call.1} parent=1 // pred_fallthru
      _
    // Predicated region
    $region14: #{tpu_custom_call.1} parent=1 // pred_check
      _
    $region15: #{tpu_custom_call.1} parent=1 // pred_check_branch
      %32 = sbr.rel (0) target = $region17
    $region16: #{tpu_custom_call.1} parent=1 // pred_region
      %33 = dma.done [#allocation3], 64
    $region17: #{tpu_custom_call.1} parent=1 // pred_fallthru
      _
    %34 = sfence
    %v35 = vld [vmem:[#allocation6] sm:$0x7]
    %s36 = sld [smem:[#allocation2]]
    %v37 = vstv %s36
    %v38 = vmul.f32 %v37, %v35
    %s39 = sld [smem:[#allocation2 + $0x1]]
    %v40 = vstv %s39
    %v41 = vmul.f32 %v40, %v35
    %v43 = vrot.slane %v41, 1
    %v45 = vadd.f32 %v38, %v43
    %s46 = sld [smem:[#allocation2 + $0x2]]
    %v47 = vstv %s46
    %v48 = vmul.f32 %v47, %v35
    %v50 = vrot.slane %v48, 2
    %v52 = vadd.f32 %v45, %v50
    %v53 = vmax.f32 %v52, 0.0
    %v54 = vmin.f32 %v53, 6.0
    %v55 = vmul.f32 %v54, 0.166667
    %vm56 = vcmask 122880
    %57 = vst.msk [vmem:[#allocation7] sm:$0x1] %vm56, %v55
    // Predicated region
    $region18: #{tpu_custom_call.1} parent=1 // pred_check
      _
    $region19: #{tpu_custom_call.1} parent=1 // pred_check_branch
      %59 = sbr.rel (0) target = $region21
    $region20: #{tpu_custom_call.1} parent=1 // pred_region
      %s61 = ssub.s32 16, 16
      %62 = vsyncadd [#allocation4], %s61
      %s64 = sshll.u32 [#allocation7], 4
      %s65 = int_to_ptr.vmem [resolvable:$true] %s64
      %67 = dma.vmem_to_hbm [thread:$0]  %s65, 16, %s2, [#allocation4]
    $region21: #{tpu_custom_call.1} parent=1 // pred_fallthru
      _
    // Predicated region
    $region22: #{tpu_custom_call.1} parent=1 // pred_check
      _
    $region23: #{tpu_custom_call.1} parent=1 // pred_check_branch
      %69 = sbr.rel (0) target = $region25
    $region24: #{tpu_custom_call.1} parent=1 // pred_region
      %70 = dma.done [#allocation4], 16
    $region25: #{tpu_custom_call.1} parent=1 // pred_fallthru
      _
    %71 = vsyncpa [#allocation3], 1
    %72 = vsyncpa [#allocation4], 1
    %73 = vsyncpa [#allocation5], 1

</llo_original>
